<compile_context>
chip_gen: v7x
topology: tpu7x:2x2x1
jax: 0.10.0
libtpu: 0.0.40
codegen_flags: <defaults>
</compile_context>

<pallas_src>
import functools

import jax
import jax.numpy as jnp
from jax.experimental import pallas as pl
from jax.experimental.pallas import tpu as pltpu


def _round_up(x, m):
    return (x + m - 1) // m * m


def _pa_residual_kernel(w_ref, bpa_ref, b2_ref, v_ref, x_ref, o_ref, *, nf, use_mxu):
    """out = x + h * sigmoid(W @ h + b_pa),  h = v + b2.   Lane-dense over H*W.

    w_ref:   (nf, nf)   VMEM  -- 1x1 conv weight (out, in), resident across grid
    bpa_ref: (nf, 1)    VMEM  -- PA bias column, resident
    b2_ref:  (nf, 1)    VMEM  -- conv2 bias column (fused here), resident
    v_ref:   (1, nf, T) VMEM  -- conv2 output tile (bias NOT yet added)
    x_ref:   (1, nf, T) VMEM  -- skip-connection tile
    o_ref:   (1, nf, T) VMEM  -- output tile
    """
    # Fuse the conv2 bias add (one fewer full-tensor HBM pass on the XLA side).
    h = v_ref[0].astype(jnp.float32) + b2_ref[...]          # (nf, T)
    w = w_ref[...].astype(jnp.float32)                      # (nf, nf)

    if use_mxu:
        # nf large enough that the systolic array beats an unrolled VPU loop.
        acc = jnp.dot(w, h, preferred_element_type=jnp.float32)
    else:
        # Tiny nf: nf rank-1 broadcast FMAs on the VPU (skip MXU pad/drain).
        acc = w[:, 0:1] * h[0:1, :]
        for k in range(1, nf):
            acc = acc + w[:, k:k + 1] * h[k:k + 1, :]

    attn = jax.nn.sigmoid(acc + bpa_ref[...])               # (nf, T), f32 throughout
    res = h * attn + x_ref[0].astype(jnp.float32)
    o_ref[0] = res.astype(o_ref.dtype)


def pa_residual(v_nobias, skip, b2, w_pa, b_pa, *, max_hw_tile=16384):
    """Fused: skip + h*sigmoid(conv1x1(h)), h = v_nobias + b2.  NCHW in/out."""
    N, C, H, W = v_nobias.shape
    HW = H * W
    itemsize = jnp.dtype(v_nobias.dtype).itemsize

    # Lane-dense spatial tiling: tile is a multiple of 128 lanes, capped so the
    # (3 tensors x double-buffer) VMEM footprint stays ~<= 24 MiB on any chip.
    vmem_budget = 24 * 1024 * 1024
    cap = max(128, (vmem_budget // (6 * C * itemsize)) // 128 * 128)
    hw_tile = min(max_hw_tile, cap, _round_up(HW, 128))
    hw_padded = _round_up(HW, hw_tile)
    num_tiles = hw_padded // hw_tile
    # Megacore: make sure there are >= 2 grid steps when N == 1.
    if N * num_tiles < 2 and hw_padded % 256 == 0:
        hw_tile = hw_padded // 2
        num_tiles = 2

    v_flat = v_nobias.reshape(N, C, HW)    # pure reshape of contiguous NCHW (free)
    s_flat = skip.reshape(N, C, HW)
    if hw_padded != HW:
        pad = ((0, 0), (0, 0), (0, hw_padded - HW))
        v_flat = jnp.pad(v_flat, pad)
        s_flat = jnp.pad(s_flat, pad)

    w2d = w_pa.astype(jnp.float32).reshape(C, C)             # (C_out, C_in)
    bpa_col = b_pa.astype(jnp.float32).reshape(C, 1)
    b2_col = b2.astype(jnp.float32).reshape(C, 1)

    cost = pl.CostEstimate(
        flops=int(N * HW * (2 * C * C + 5 * C)),
        transcendentals=int(N * HW * C),
        bytes_accessed=int(3 * N * C * hw_padded * itemsize
                           + (w2d.size + bpa_col.size + b2_col.size) * 4),
    )

    kernel = functools.partial(_pa_residual_kernel, nf=C, use_mxu=(C >= 16))
    out_flat = pl.pallas_call(
        kernel,
        out_shape=jax.ShapeDtypeStruct((N, C, hw_padded), v_nobias.dtype),
        grid_spec=pltpu.PrefetchScalarGridSpec(
            num_scalar_prefetch=0,
            grid=(N, num_tiles),
            in_specs=[
                pl.BlockSpec((C, C), lambda n, j: (0, 0)),               # PA weight (resident)
                pl.BlockSpec((C, 1), lambda n, j: (0, 0)),               # PA bias   (resident)
                pl.BlockSpec((C, 1), lambda n, j: (0, 0)),               # conv2 bias (resident)
                pl.BlockSpec((1, C, hw_tile), lambda n, j: (n, 0, j)),   # conv2 output
                pl.BlockSpec((1, C, hw_tile), lambda n, j: (n, 0, j)),   # skip connection
            ],
            out_specs=pl.BlockSpec((1, C, hw_tile), lambda n, j: (n, 0, j)),
        ),
        compiler_params=pltpu.CompilerParams(
            dimension_semantics=("parallel", "parallel"),
            vmem_limit_bytes=32 * 1024 * 1024,
        ),
        cost_estimate=cost,
    )(w2d, bpa_col, b2_col, v_flat, s_flat)

    if hw_padded != HW:
        out_flat = out_flat[:, :, :HW]
    return out_flat.reshape(N, C, H, W)


def _conv3x3_same(x, w):
    return jax.lax.conv_general_dilated(
        x, w, window_strides=(1, 1), padding="SAME",
        dimension_numbers=("NCHW", "OIHW", "NCHW"))


@jax.jit
def rpab_forward(x, w1, b1, w2, b2, w_pa, b_pa):
    h = _conv3x3_same(x, w1) + b1[None, :, None, None]
    h = jnp.maximum(h, 0.0)                         # nn.ReLU(True)
    h = _conv3x3_same(h, w2)                        # bias b2 is fused into the kernel
    return pa_residual(h, x, b2, w_pa, b_pa)        # fused bias + PA + residual (Pallas)


def rpab_reference(x, w1, b1, w2, b2, w_pa, b_pa):
    h = _conv3x3_same(x, w1) + b1[None, :, None, None]
    h = jnp.maximum(h, 0.0)
    h = _conv3x3_same(h, w2) + b2[None, :, None, None]
    y = jnp.einsum("nchw,oc->nohw", h, w_pa) + b_pa[None, :, None, None]
    return h * jax.nn.sigmoid(y) + x


if __name__ == "__main__":
    nf, N, H, W, ks = 4, 2, 16, 16, 3

    keys = jax.random.split(jax.random.PRNGKey(0), 7)
    x = jax.random.normal(keys[0], (N, nf, H, W), dtype=jnp.float32)
    w1 = jax.random.normal(keys[1], (nf, nf, ks, ks), dtype=jnp.float32) * 0.1
    b1 = jax.random.normal(keys[2], (nf,), dtype=jnp.float32) * 0.1
    w2 = jax.random.normal(keys[3], (nf, nf, ks, ks), dtype=jnp.float32) * 0.1
    b2 = jax.random.normal(keys[4], (nf,), dtype=jnp.float32) * 0.1
    w_pa = jax.random.normal(keys[5], (nf, nf), dtype=jnp.float32) * 0.1
    b_pa = jax.random.normal(keys[6], (nf,), dtype=jnp.float32) * 0.1

    out = rpab_forward(x, w1, b1, w2, b2, w_pa, b_pa)
    out = jax.block_until_ready(out)

    ref = rpab_reference(x, w1, b1, w2, b2, w_pa, b_pa)
    assert out.shape == ref.shape, "shape mismatch vs reference"
    assert jnp.allclose(out, ref, atol=1e-5, rtol=1e-5), "mismatch vs reference"

    print("KERNEL_OK")
</pallas_src>

<mosaic_0001>
module attributes {stable_mosaic.version = 11 : i64} {
  func.func @_pa_residual_kernel(%arg0: i32, %arg1: i32, %arg2: memref<4x4xf32, #tpu.memory_space<vmem>>, %arg3: memref<4x1xf32, #tpu.memory_space<vmem>>, %arg4: memref<4x1xf32, #tpu.memory_space<vmem>>, %arg5: memref<1x4x256xf32, #tpu.memory_space<vmem>>, %arg6: memref<1x4x256xf32, #tpu.memory_space<vmem>>, %arg7: memref<1x4x256xf32, #tpu.memory_space<vmem>>) attributes {dimension_semantics = [#tpu.dimension_semantics<parallel>, #tpu.dimension_semantics<parallel>], iteration_bounds = array<i64: 2, 1>, scalar_prefetch = 0 : i64, scratch_operands = 0 : i64, tpu.core_type = #tpu.core_type<tc>, window_params = [{pipeline_mode = #tpu.pipeline_mode<synchronous>, transform_indices = @transform_0, window_bounds = array<i64: 4, 4>}, {pipeline_mode = #tpu.pipeline_mode<synchronous>, transform_indices = @transform_1, window_bounds = array<i64: 4, 1>}, {pipeline_mode = #tpu.pipeline_mode<synchronous>, transform_indices = @transform_2, window_bounds = array<i64: 4, 1>}, {transform_indices = @transform_3, window_bounds = array<i64: 1, 4, 256>}, {transform_indices = @transform_4, window_bounds = array<i64: 1, 4, 256>}, {transform_indices = @transform_5, window_bounds = array<i64: 1, 4, 256>}]} {
    %c0 = arith.constant 0 : index
    %c0_0 = arith.constant 0 : index
    %c0_1 = arith.constant 0 : index
    %0 = vector.load %arg5[%c0, %c0_0, %c0_1] : memref<1x4x256xf32, #tpu.memory_space<vmem>>, vector<1x4x256xf32>
    %1 = vector.shape_cast %0 : vector<1x4x256xf32> to vector<4x256xf32>
    %c0_2 = arith.constant 0 : index
    %c0_3 = arith.constant 0 : index
    %2 = vector.load %arg4[%c0_2, %c0_3] : memref<4x1xf32, #tpu.memory_space<vmem>>, vector<4x1xf32>
    %3 = vector.broadcast %2 : vector<4x1xf32> to vector<4x256xf32>
    %4 = arith.addf %1, %3 : vector<4x256xf32>
    %c0_4 = arith.constant 0 : index
    %c0_5 = arith.constant 0 : index
    %5 = vector.load %arg2[%c0_4, %c0_5] : memref<4x4xf32, #tpu.memory_space<vmem>>, vector<4x4xf32>
    %6 = vector.extract_strided_slice %5 {offsets = [0, 0], sizes = [4, 1], strides = [1, 1]} : vector<4x4xf32> to vector<4x1xf32>
    %7 = vector.extract_strided_slice %4 {offsets = [0, 0], sizes = [1, 256], strides = [1, 1]} : vector<4x256xf32> to vector<1x256xf32>
    %8 = vector.broadcast %6 : vector<4x1xf32> to vector<4x256xf32>
    %9 = vector.broadcast %7 : vector<1x256xf32> to vector<4x256xf32>
    %10 = arith.mulf %8, %9 : vector<4x256xf32>
    %11 = vector.extract_strided_slice %5 {offsets = [0, 1], sizes = [4, 1], strides = [1, 1]} : vector<4x4xf32> to vector<4x1xf32>
    %12 = vector.extract_strided_slice %4 {offsets = [1, 0], sizes = [1, 256], strides = [1, 1]} : vector<4x256xf32> to vector<1x256xf32>
    %13 = vector.broadcast %11 : vector<4x1xf32> to vector<4x256xf32>
    %14 = vector.broadcast %12 : vector<1x256xf32> to vector<4x256xf32>
    %15 = arith.mulf %13, %14 : vector<4x256xf32>
    %16 = arith.addf %10, %15 : vector<4x256xf32>
    %17 = vector.extract_strided_slice %5 {offsets = [0, 2], sizes = [4, 1], strides = [1, 1]} : vector<4x4xf32> to vector<4x1xf32>
    %18 = vector.extract_strided_slice %4 {offsets = [2, 0], sizes = [1, 256], strides = [1, 1]} : vector<4x256xf32> to vector<1x256xf32>
    %19 = vector.broadcast %17 : vector<4x1xf32> to vector<4x256xf32>
    %20 = vector.broadcast %18 : vector<1x256xf32> to vector<4x256xf32>
    %21 = arith.mulf %19, %20 : vector<4x256xf32>
    %22 = arith.addf %16, %21 : vector<4x256xf32>
    %23 = vector.extract_strided_slice %5 {offsets = [0, 3], sizes = [4, 1], strides = [1, 1]} : vector<4x4xf32> to vector<4x1xf32>
    %24 = vector.extract_strided_slice %4 {offsets = [3, 0], sizes = [1, 256], strides = [1, 1]} : vector<4x256xf32> to vector<1x256xf32>
    %25 = vector.broadcast %23 : vector<4x1xf32> to vector<4x256xf32>
    %26 = vector.broadcast %24 : vector<1x256xf32> to vector<4x256xf32>
    %27 = arith.mulf %25, %26 : vector<4x256xf32>
    %28 = arith.addf %22, %27 : vector<4x256xf32>
    %c0_6 = arith.constant 0 : index
    %c0_7 = arith.constant 0 : index
    %29 = vector.load %arg3[%c0_6, %c0_7] : memref<4x1xf32, #tpu.memory_space<vmem>>, vector<4x1xf32>
    %30 = vector.broadcast %29 : vector<4x1xf32> to vector<4x256xf32>
    %31 = arith.addf %28, %30 : vector<4x256xf32>
    %32 = arith.negf %31 : vector<4x256xf32>
    %33 = math.exp %32 : vector<4x256xf32>
    %cst = arith.constant 1.000000e+00 : f32
    %34 = vector.broadcast %cst : f32 to vector<4x256xf32>
    %35 = arith.addf %34, %33 : vector<4x256xf32>
    %36 = arith.divf %34, %35 : vector<4x256xf32>
    %37 = arith.mulf %4, %36 : vector<4x256xf32>
    %c0_8 = arith.constant 0 : index
    %c0_9 = arith.constant 0 : index
    %c0_10 = arith.constant 0 : index
    %38 = vector.load %arg6[%c0_8, %c0_9, %c0_10] : memref<1x4x256xf32, #tpu.memory_space<vmem>>, vector<1x4x256xf32>
    %39 = vector.shape_cast %38 : vector<1x4x256xf32> to vector<4x256xf32>
    %40 = arith.addf %37, %39 : vector<4x256xf32>
    %c0_11 = arith.constant 0 : index
    %c0_12 = arith.constant 0 : index
    %c0_13 = arith.constant 0 : index
    %41 = vector.load %arg7[%c0_11, %c0_12, %c0_13] : memref<1x4x256xf32, #tpu.memory_space<vmem>>, vector<1x4x256xf32>
    %42 = vector.shape_cast %41 : vector<1x4x256xf32> to vector<4x256xf32>
    %43 = vector.shape_cast %40 : vector<4x256xf32> to vector<1x4x256xf32>
    tpu.vector_store %arg7[%c0_11, %c0_12, %c0_13], %43 {strides = array<i32>} : memref<1x4x256xf32, #tpu.memory_space<vmem>>, vector<1x4x256xf32>,
    return
  }
  func.func @transform_0(%arg0: i32, %arg1: i32) -> (i32, i32) {
    %c0_i32 = arith.constant 0 : i32
    %c0_i32_0 = arith.constant 0 : i32
    %c0_i32_1 = arith.constant 0 : i32
    return %c0_i32, %c0_i32_0 : i32, i32
  }
  func.func @transform_1(%arg0: i32, %arg1: i32) -> (i32, i32) {
    %c0_i32 = arith.constant 0 : i32
    %c0_i32_0 = arith.constant 0 : i32
    %c0_i32_1 = arith.constant 0 : i32
    return %c0_i32, %c0_i32_0 : i32, i32
  }
  func.func @transform_2(%arg0: i32, %arg1: i32) -> (i32, i32) {
    %c0_i32 = arith.constant 0 : i32
    %c0_i32_0 = arith.constant 0 : i32
    %c0_i32_1 = arith.constant 0 : i32
    return %c0_i32, %c0_i32_0 : i32, i32
  }
  func.func @transform_3(%arg0: i32, %arg1: i32) -> (i32, i32, i32) {
    %c0_i32 = arith.constant 0 : i32
    %c0_i32_0 = arith.constant 0 : i32
    return %arg0, %c0_i32, %arg1 : i32, i32, i32
  }
  func.func @transform_4(%arg0: i32, %arg1: i32) -> (i32, i32, i32) {
    %c0_i32 = arith.constant 0 : i32
    %c0_i32_0 = arith.constant 0 : i32
    return %arg0, %c0_i32, %arg1 : i32, i32, i32
  }
  func.func @transform_5(%arg0: i32, %arg1: i32) -> (i32, i32, i32) {
    %c0_i32 = arith.constant 0 : i32
    %c0_i32_0 = arith.constant 0 : i32
    return %arg0, %c0_i32, %arg1 : i32, i32, i32
  }
}

</mosaic_0001>

<llo_original>
// kernel: rpab_forward.1
$region0: #{rpab_forward.1}
  #allocation0 [shape = 'u32[]', space=smem, size = 0x4, offset = 0x4, fixed_abs, tag = 'smem constant byte address 0x4 - core index']
  #allocation1 [shape = 'u32[144,128]{1,0:T(1,128)}', space=vmem, size = 0x12000, scoped, tag = 'internal scratch']
  %s0 = inlined_call_operand.vmem [shape: f32[4,4], index: 0, kind: input, shape index: {}]
  %s1 = inlined_call_operand.vmem [shape: f32[4,1], index: 1, kind: input, shape index: {}]
  %s2 = inlined_call_operand.vmem [shape: f32[4,1], index: 2, kind: input, shape index: {}]
  %s3 = inlined_call_operand.vmem [shape: f32[2,4,256], index: 3, kind: input, shape index: {}]
  %s4 = inlined_call_operand.vmem [shape: f32[2,4,256], index: 4, kind: input, shape index: {}]
  %s5 = inlined_call_operand.vmem [shape: f32[2,4,256], index: 5, kind: output, shape index: {}]
  %s6 = sld [smem:[#allocation0]]
  $region53: #{rpab_forward.1} parent=0
    _
  %s8 = ssub.s32 1, %s6
  %s9 = scalar_select 0, %s8, %s6
  loop: start=0, step=1, limit=4
  $region2: #{rpab_forward.1} parent=0 // loop_pre_header
    _
  $region3: #{rpab_forward.1} parent=0 // loop_header
    %s11 = sphi 0, %s15
    %p12 = scmp.ge.s32.totalorder %s11, 4
    %s18 = sphi 0, %s30
    %s19 = sphi 0, %s26
    %s20 = sphi 0, %s18
    %s21 = sphi 0, %s19
    %s22 = sphi 0, %s20
    %s23 = sphi 0, %s21
    %s31 = sphi 0, %s31
    %s33 = sphi 0, %s31
    %s34 = sphi 0, %s33
    %s48 = sphi 0, %s34
    %s52 = sphi 0, %s52
    %s54 = sphi 0, %s52
    %s55 = sphi 0, %s54
    %s69 = sphi 0, %s55
    %s73 = sphi 0, %s73
    %s75 = sphi 0, %s73
    %s76 = sphi 0, %s75
    %s90 = sphi 0, %s76
    %s98 = sphi 0, %s100
    %s101 = sphi 0, %s98
    %s102 = sphi 0, %s101
    %s118 = sphi 0, %s102
    %s126 = sphi 0, %s128
    %s129 = sphi 0, %s126
    %s130 = sphi 0, %s129
    %s146 = sphi 0, %s130
    %s154 = sphi 0, %s156
    %s157 = sphi 0, %s154
    %s158 = sphi 0, %s157
    %s174 = sphi 0, %s158
  $region4: #{rpab_forward.1} parent=0 // loop_header_branch
    %14 = sbr.rel (%p12) target = $region8
  $region5: #{rpab_forward.1} parent=0 // loop_body
    %s16 = ssub.s32 %s11, 1
    %s17 = ssub.s32 %s11, 2
    %s24 = sadd.s32 1, %s19
    %p25 = scmp.ge.s32.totalorder %s24, 1
    %s26 = scalar_select %p25, 0, %s24
    %s27 = sadd.s32 1, %s18
    %s28 = scalar_select %p25, %s27, %s18
    %p29 = scmp.ge.s32.totalorder %s28, 2
    %s30 = scalar_select %p29, 0, %s28
    %s32 = sadd.s32 %s31, 1
    %p35 = scmp.eq.s32.totalorder %s11, 1
    %p36 = scmp.ne.s32.totalorder %s31, %s33
    %p37 = scmp.eq.s32.totalorder %s11, 0
    %p38 = por %p36, %p37
    %p39 = scmp.ne.s32.totalorder %s31, %s33
    %p40 = scmp.eq.s32.totalorder %s16, 1
    %p41 = por %p39, %p40
    %p42 = scmp.ne.s32.totalorder %s33, %s34
    %p43 = scmp.eq.s32.totalorder %s16, 0
    %p44 = por %p42, %p43
    %p45 = scmp.ne.s32.totalorder %s33, %s34
    %p46 = scmp.eq.s32.totalorder %s17, 1
    %p47 = por %p45, %p46
    %p49 = scmp.ne.s32.totalorder %s34, %s48
    %p50 = scmp.eq.s32.totalorder %s17, 0
    %p51 = por %p49, %p50
    %s53 = sadd.s32 %s52, 1
    %p56 = scmp.eq.s32.totalorder %s11, 1
    %p57 = scmp.ne.s32.totalorder %s52, %s54
    %p58 = scmp.eq.s32.totalorder %s11, 0
    %p59 = por %p57, %p58
    %p60 = scmp.ne.s32.totalorder %s52, %s54
    %p61 = scmp.eq.s32.totalorder %s16, 1
    %p62 = por %p60, %p61
    %p63 = scmp.ne.s32.totalorder %s54, %s55
    %p64 = scmp.eq.s32.totalorder %s16, 0
    %p65 = por %p63, %p64
    %p66 = scmp.ne.s32.totalorder %s54, %s55
    %p67 = scmp.eq.s32.totalorder %s17, 1
    %p68 = por %p66, %p67
    %p70 = scmp.ne.s32.totalorder %s55, %s69
    %p71 = scmp.eq.s32.totalorder %s17, 0
    %p72 = por %p70, %p71
    %s74 = sadd.s32 %s73, 1
    %p77 = scmp.eq.s32.totalorder %s11, 1
    %p78 = scmp.ne.s32.totalorder %s73, %s75
    %p79 = scmp.eq.s32.totalorder %s11, 0
    %p80 = por %p78, %p79
    %p81 = scmp.ne.s32.totalorder %s73, %s75
    %p82 = scmp.eq.s32.totalorder %s16, 1
    %p83 = por %p81, %p82
    %p84 = scmp.ne.s32.totalorder %s75, %s76
    %p85 = scmp.eq.s32.totalorder %s16, 0
    %p86 = por %p84, %p85
    %p87 = scmp.ne.s32.totalorder %s75, %s76
    %p88 = scmp.eq.s32.totalorder %s17, 1
    %p89 = por %p87, %p88
    %p91 = scmp.ne.s32.totalorder %s76, %s90
    %p92 = scmp.eq.s32.totalorder %s17, 0
    %p93 = por %p91, %p92
    %s94 = ssub.s32 %s18, %s30
    %s95 = ssub.s32 %s19, %s26
    %s96 = sor.u32 %s94, %s95
    %p97 = scmp.eq.s32.totalorder %s96, 0
    %s99 = sadd.s32 %s98, 1
    %s100 = scalar_select %p97, %s98, %s99
    %p103 = pneg %p97
    %p104 = scmp.eq.s32.totalorder %s11, 1
    %p105 = por %p103, %p104
    %p106 = scmp.ne.s32.totalorder %s98, %s101
    %p107 = scmp.eq.s32.totalorder %s11, 0
    %p108 = por %p106, %p107
    %p109 = scmp.ne.s32.totalorder %s98, %s101
    %p110 = scmp.eq.s32.totalorder %s16, 1
    %p111 = por %p109, %p110
    %p112 = scmp.ne.s32.totalorder %s101, %s102
    %p113 = scmp.eq.s32.totalorder %s16, 0
    %p114 = por %p112, %p113
    %p115 = scmp.ne.s32.totalorder %s101, %s102
    %p116 = scmp.eq.s32.totalorder %s17, 1
    %p117 = por %p115, %p116
    %p119 = scmp.ne.s32.totalorder %s102, %s118
    %p120 = scmp.eq.s32.totalorder %s17, 0
    %p121 = por %p119, %p120
    %s122 = ssub.s32 %s18, %s30
    %s123 = ssub.s32 %s19, %s26
    %s124 = sor.u32 %s122, %s123
    %p125 = scmp.eq.s32.totalorder %s124, 0
    %s127 = sadd.s32 %s126, 1
    %s128 = scalar_select %p125, %s126, %s127
    %p131 = pneg %p125
    %p132 = scmp.eq.s32.totalorder %s11, 1
    %p133 = por %p131, %p132
    %p134 = scmp.ne.s32.totalorder %s126, %s129
    %p135 = scmp.eq.s32.totalorder %s11, 0
    %p136 = por %p134, %p135
    %p137 = scmp.ne.s32.totalorder %s126, %s129
    %p138 = scmp.eq.s32.totalorder %s16, 1
    %p139 = por %p137, %p138
    %p140 = scmp.ne.s32.totalorder %s129, %s130
    %p141 = scmp.eq.s32.totalorder %s16, 0
    %p142 = por %p140, %p141
    %p143 = scmp.ne.s32.totalorder %s129, %s130
    %p144 = scmp.eq.s32.totalorder %s17, 1
    %p145 = por %p143, %p144
    %p147 = scmp.ne.s32.totalorder %s130, %s146
    %p148 = scmp.eq.s32.totalorder %s17, 0
    %p149 = por %p147, %p148
    %s150 = ssub.s32 %s18, %s30
    %s151 = ssub.s32 %s19, %s26
    %s152 = sor.u32 %s150, %s151
    %p153 = scmp.eq.s32.totalorder %s152, 0
    %s155 = sadd.s32 %s154, 1
    %s156 = scalar_select %p153, %s154, %s155
    %p159 = pneg %p153
    %p160 = scmp.eq.s32.totalorder %s11, 1
    %p161 = por %p159, %p160
    %p162 = scmp.ne.s32.totalorder %s154, %s157
    %p163 = scmp.eq.s32.totalorder %s11, 0
    %p164 = por %p162, %p163
    %p165 = scmp.ne.s32.totalorder %s154, %s157
    %p166 = scmp.eq.s32.totalorder %s16, 1
    %p167 = por %p165, %p166
    %p168 = scmp.ne.s32.totalorder %s157, %s158
    %p169 = scmp.eq.s32.totalorder %s16, 0
    %p170 = por %p168, %p169
    %p171 = scmp.ne.s32.totalorder %s157, %s158
    %p172 = scmp.eq.s32.totalorder %s17, 1
    %p173 = por %p171, %p172
    %p175 = scmp.ne.s32.totalorder %s158, %s174
    %p176 = scmp.eq.s32.totalorder %s17, 0
    %p177 = por %p175, %p176
    %p178 = scmp.le.s32.totalorder 1, %s11
    %p179 = scmp.lt.s32.totalorder %s11, 3
    %p180 = pnand %p178, %p179
    %p181 = pneg %p180
    // Predicated region
    $region9: #{rpab_forward.1} parent=5 // pred_check
      _
    $region10: #{rpab_forward.1} parent=5 // pred_check_branch
      %183 = sbr.rel (%p180) target = $region12
    $region11: #{rpab_forward.1} parent=5 // pred_region
      %s184 = ssub.s32 %s11, 1
      // Predicated region
      $region13: #{rpab_forward.1} parent=11 // pred_check
        %p185 = pneg %p44
      $region14: #{rpab_forward.1} parent=11 // pred_check_branch
        %187 = sbr.rel (%p185) target = $region16
      $region15: #{rpab_forward.1} parent=11 // pred_region
        _
      $region16: #{rpab_forward.1} parent=11 // pred_fallthru
        _
      // Predicated region
      $region17: #{rpab_forward.1} parent=11 // pred_check
        %p188 = pneg %p65
      $region18: #{rpab_forward.1} parent=11 // pred_check_branch
        %190 = sbr.rel (%p188) target = $region20
      $region19: #{rpab_forward.1} parent=11 // pred_region
        _
      $region20: #{rpab_forward.1} parent=11 // pred_fallthru
        _
      // Predicated region
      $region21: #{rpab_forward.1} parent=11 // pred_check
        %p191 = pneg %p86
      $region22: #{rpab_forward.1} parent=11 // pred_check_branch
        %193 = sbr.rel (%p191) target = $region24
      $region23: #{rpab_forward.1} parent=11 // pred_region
        _
      $region24: #{rpab_forward.1} parent=11 // pred_fallthru
        _
    $region12: #{rpab_forward.1} parent=5 // pred_fallthru
      _
    %p194 = scmp.lt.s32.totalorder %s11, 2
    // Predicated region
    $region25: #{rpab_forward.1} parent=5 // pred_check
      %p195 = pneg %p194
    $region26: #{rpab_forward.1} parent=5 // pred_check_branch
      %197 = sbr.rel (%p195) target = $region28
    $region27: #{rpab_forward.1} parent=5 // pred_region
      // Predicated region
      $region29: #{rpab_forward.1} parent=27 // pred_check
        %p198 = pneg %p108
      $region30: #{rpab_forward.1} parent=27 // pred_check_branch
        %200 = sbr.rel (%p198) target = $region32
      $region31: #{rpab_forward.1} parent=27 // pred_region
        %s201 = smul.u32 2, %s19
        %p202 = scmp.lt.s32.totalorder %s18, 1
        %s203 = scalar_select %p202, %s18, 1
        %p204 = scmp.lt.s32.totalorder %s201, 1
        %s205 = scalar_select %p204, %s201, 1
        %s206 = smul.addr %s203, 2
        %s207 = sadd.s32 %s205, %s206
        %s208 = smul.addr %s207, 4
        %s209 = scalar_lea.vmem %s3, %s208
        %s210 = smul.u32 2, %s19
      $region32: #{rpab_forward.1} parent=27 // pred_fallthru
        _
      // Predicated region
      $region33: #{rpab_forward.1} parent=27 // pred_check
        %p211 = pneg %p136
      $region34: #{rpab_forward.1} parent=27 // pred_check_branch
        %213 = sbr.rel (%p211) target = $region36
      $region35: #{rpab_forward.1} parent=27 // pred_region
        %s214 = smul.u32 2, %s19
        %p215 = scmp.lt.s32.totalorder %s18, 1
        %s216 = scalar_select %p215, %s18, 1
        %p217 = scmp.lt.s32.totalorder %s214, 1
        %s218 = scalar_select %p217, %s214, 1
        %s219 = smul.addr %s216, 2
        %s220 = sadd.s32 %s218, %s219
        %s221 = smul.addr %s220, 4
        %s222 = scalar_lea.vmem %s4, %s221
        %s223 = smul.u32 2, %s19
      $region36: #{rpab_forward.1} parent=27 // pred_fallthru
        _
    $region28: #{rpab_forward.1} parent=5 // pred_fallthru
      _
    %p224 = scmp.le.s32.totalorder 1, %s11
    %p225 = scmp.lt.s32.totalorder %s11, 3
    %p226 = pnand %p224, %p225
    %p227 = pneg %p226
    // Predicated region
    $region37: #{rpab_forward.1} parent=5 // pred_check
      _
    $region38: #{rpab_forward.1} parent=5 // pred_check_branch
      %229 = sbr.rel (%p226) target = $region40
    $region39: #{rpab_forward.1} parent=5 // pred_region
      %s230 = ssub.s32 %s11, 1
      %p231 = pneg %p44
      %p232 = pneg %p41
      %p233 = pneg %p65
      %p234 = pneg %p62
      %p235 = pneg %p86
      %p236 = pneg %p83
      %s237 = smul.u32 2, %s21
      %p238 = scmp.lt.s32.totalorder %s20, 1
      %s239 = scalar_select %p238, %s20, 1
      %p240 = scmp.lt.s32.totalorder %s237, 1
      %s241 = scalar_select %p240, %s237, 1
      %s242 = smul.addr %s239, 2
      %s243 = sadd.s32 %s241, %s242
      %s244 = smul.addr %s243, 4
      %s245 = scalar_lea.vmem %s3, %s244
      %p246 = pneg %p114
      %p247 = pneg %p111
      %s248 = smul.u32 2, %s21
      %p249 = scmp.lt.s32.totalorder %s20, 1
      %s250 = scalar_select %p249, %s20, 1
      %p251 = scmp.lt.s32.totalorder %s248, 1
      %s252 = scalar_select %p251, %s248, 1
      %s253 = smul.addr %s250, 2
      %s254 = sadd.s32 %s252, %s253
      %s255 = smul.addr %s254, 4
      %s256 = scalar_lea.vmem %s4, %s255
      %p257 = pneg %p142
      %p258 = pneg %p139
      %p259 = pneg %p170
      %p260 = pneg %p167
      %s261 = smul.u32 2, %s21
      %p262 = scmp.lt.s32.totalorder %s20, 1
      %s263 = scalar_select %p262, %s20, 1
      %p264 = scmp.lt.s32.totalorder %s261, 1
      %s265 = scalar_select %p264, %s261, 1
      %s266 = smul.addr %s263, 2
      %s267 = sadd.s32 %s265, %s266
      %s268 = smul.addr %s267, 4
      %s269 = scalar_lea.vmem %s5, %s268
      %s270 = smul.u32 2, %s21
      %p271 = scmp.lt.s32.totalorder %s20, 1
      %s272 = scalar_select %p271, %s20, 1
      %p273 = scmp.lt.s32.totalorder %s270, 1
      %s274 = scalar_select %p273, %s270, 1
      %s275 = smul.addr %s272, 2
      %s276 = sadd.s32 %s274, %s275
      %s277 = smul.addr %s276, 4
      %s278 = scalar_lea.vmem %s3, %s277
      %s279 = smul.u32 2, %s21
      %s280 = smul.u32 2, %s21
      %p281 = scmp.lt.s32.totalorder %s20, 1
      %s282 = scalar_select %p281, %s20, 1
      %p283 = scmp.lt.s32.totalorder %s280, 1
      %s284 = scalar_select %p283, %s280, 1
      %s285 = smul.addr %s282, 2
      %s286 = sadd.s32 %s284, %s285
      %s287 = smul.addr %s286, 4
      %s288 = scalar_lea.vmem %s4, %s287
      %s289 = smul.u32 2, %s21
      %s290 = smul.u32 2, %s21
      %p291 = scmp.lt.s32.totalorder %s20, 1
      %s292 = scalar_select %p291, %s20, 1
      %p293 = scmp.lt.s32.totalorder %s290, 1
      %s294 = scalar_select %p293, %s290, 1
      %s295 = smul.addr %s292, 2
      %s296 = sadd.s32 %s294, %s295
      %s297 = smul.addr %s296, 4
      %s298 = scalar_lea.vmem %s5, %s297
      %s299 = smul.u32 2, %s21
      %v300 = vld [vmem:[%s278] sm:$0xff]
      %v301 = vld [vmem:[%s2] sm:$0xf]
      %303 = vset.pattern.permute.xlu0 0
      %304 = vperm.xlu0 %303, %v301
      %v305 = vpop.permute.xlu0 %304
      %v307 = vunpack.c.l.s4 839922192
      %v308 = vunpack.c.0.s8 %v307
      %v309 = vlaneseq
      %v310 = vshrl.u32 %v309, 7
      %v311 = vsub.s32 %v308, %v310
      %v312 = vrot.slane %v305, %v311
      %v314 = vadd.f32 %v300, %v312
      %v315 = vld [vmem:[%s0] sm:$0xf]
      %317 = vset.pattern.permute.xlu0 0
      %318 = vperm.xlu0 %317, %v315
      %v319 = vpop.permute.xlu0 %318
      %v322 = vlaneseq
      %v323 = vshrl.u32 %v322, 7
      %v324 = vsub.s32 0, %v323
      %v325 = vrot.slane %v314, %v324
      %v326 = vlaneseq
      %v327 = vshrl.u32 %v326, 7
      %v328 = vsub.s32 4, %v327
      %v329 = vrot.slane %v314, %v328
      %v332 = vlaneseq
      %v333 = vshrl.u32 %v332, 7
      %v334 = vsub.s32 0, %v333
      %v335 = vrot.slane %v325, %v334
      %v336 = vlaneseq
      %v337 = vshrl.u32 %v336, 7
      %v338 = vsub.s32 0, %v337
      %v339 = vrot.slane %v329, %v338
      %v340 = vmul.f32 %v319, %v335
      %v341 = vmul.f32 %v319, %v339
      %342 = vset.pattern.permute.xlu0 1
      %343 = vperm.xlu0 %342, %v315
      %v344 = vpop.permute.xlu0 %343
      %v346 = vlaneseq
      %v347 = vshrl.u32 %v346, 7
      %v348 = vsub.s32 1, %v347
      %v349 = vrot.slane %v314, %v348
      %v350 = vlaneseq
      %v351 = vshrl.u32 %v350, 7
      %v352 = vsub.s32 5, %v351
      %v353 = vrot.slane %v314, %v352
      %v356 = vlaneseq
      %v357 = vshrl.u32 %v356, 7
      %v358 = vsub.s32 1, %v357
      %v359 = vrot.slane %v349, %v358
      %v360 = vlaneseq
      %v361 = vshrl.u32 %v360, 7
      %v362 = vsub.s32 1, %v361
      %v363 = vrot.slane %v353, %v362
      %v364 = vmul.f32 %v344, %v359
      %v365 = vmul.f32 %v344, %v363
      %v366 = vadd.f32 %v340, %v364
      %v367 = vadd.f32 %v341, %v365
      %368 = vset.pattern.permute.xlu0 2
      %369 = vperm.xlu0 %368, %v315
      %v370 = vpop.permute.xlu0 %369
      %v372 = vlaneseq
      %v373 = vshrl.u32 %v372, 7
      %v374 = vsub.s32 2, %v373
      %v375 = vrot.slane %v314, %v374
      %v376 = vlaneseq
      %v377 = vshrl.u32 %v376, 7
      %v378 = vsub.s32 6, %v377
      %v379 = vrot.slane %v314, %v378
      %v382 = vlaneseq
      %v383 = vshrl.u32 %v382, 7
      %v384 = vsub.s32 2, %v383
      %v385 = vrot.slane %v375, %v384
      %v386 = vlaneseq
      %v387 = vshrl.u32 %v386, 7
      %v388 = vsub.s32 2, %v387
      %v389 = vrot.slane %v379, %v388
      %v390 = vmul.f32 %v370, %v385
      %v391 = vmul.f32 %v370, %v389
      %v392 = vadd.f32 %v366, %v390
      %v393 = vadd.f32 %v367, %v391
      %394 = vset.pattern.permute.xlu0 3
      %395 = vperm.xlu0 %394, %v315
      %v396 = vpop.permute.xlu0 %395
      %v398 = vlaneseq
      %v399 = vshrl.u32 %v398, 7
      %v400 = vsub.s32 3, %v399
      %v401 = vrot.slane %v314, %v400
      %v402 = vlaneseq
      %v403 = vshrl.u32 %v402, 7
      %v404 = vsub.s32 7, %v403
      %v405 = vrot.slane %v314, %v404
      %v408 = vlaneseq
      %v409 = vshrl.u32 %v408, 7
      %v410 = vsub.s32 3, %v409
      %v411 = vrot.slane %v401, %v410
      %v412 = vlaneseq
      %v413 = vshrl.u32 %v412, 7
      %v414 = vsub.s32 3, %v413
      %v415 = vrot.slane %v405, %v414
      %v416 = vmul.f32 %v396, %v411
      %v417 = vmul.f32 %v396, %v415
      %v418 = vadd.f32 %v392, %v416
      %v419 = vadd.f32 %v393, %v417
      %v420 = vld [vmem:[%s1] sm:$0xf]
      %422 = vset.pattern.permute.xlu0 0
      %423 = vperm.xlu0 %422, %v420
      %v424 = vpop.permute.xlu0 %423
      %v426 = vadd.f32 %v418, %v424
      %v427 = vadd.f32 %v419, %v424
      %v428 = vxor.u32 %v426, 2147483648
      %v429 = vxor.u32 %v427, 2147483648
      %v430 = vmul.f32 %v428, 1.442695
      %v431 = vpow.pop %v430
      %v432 = vmul.f32 %v429, 1.442695
      %v433 = vpow.pop %v432
      %v434 = vadd.f32 %v431, 1.0
      %v435 = vadd.f32 %v433, 1.0
      %v436 = vrcp.pop %v434
      %v437 = vmul.f32 1.0, %v436
      %v438 = vrcp.pop %v435
      %v439 = vmul.f32 1.0, %v438
      %v442 = vcombine.low %v437, %v439
      %v444 = vmul.f32 %v314, %v442
      %v445 = vld [vmem:[%s288] sm:$0xff]
      %v446 = vadd.f32 %v444, %v445
      %447 = vst [vmem:[%s298] sm:$0xff] %v446
      %s448 = smul.u32 2, %s21
      %p449 = scmp.lt.s32.totalorder %s20, 1
      %s450 = scalar_select %p449, %s20, 1
      %p451 = scmp.lt.s32.totalorder %s448, 1
      %s452 = scalar_select %p451, %s448, 1
      %s453 = smul.addr %s450, 2
      %s454 = sadd.s32 %s452, %s453
      %s455 = smul.addr %s454, 4
      %s456 = scalar_lea.vmem %s5, %s455
      // Predicated region
      $region41: #{rpab_forward.1} parent=39 // pred_check
        %p457 = pneg %p167
      $region42: #{rpab_forward.1} parent=39 // pred_check_branch
        %459 = sbr.rel (%p457) target = $region44
      $region43: #{rpab_forward.1} parent=39 // pred_region
        %s460 = smul.u32 2, %s21
      $region44: #{rpab_forward.1} parent=39 // pred_fallthru
        _
    $region40: #{rpab_forward.1} parent=5 // pred_fallthru
      _
    %p461 = scmp.le.s32.totalorder 2, %s11
    // Predicated region
    $region45: #{rpab_forward.1} parent=5 // pred_check
      %p462 = pneg %p461
    $region46: #{rpab_forward.1} parent=5 // pred_check_branch
      %464 = sbr.rel (%p462) target = $region48
    $region47: #{rpab_forward.1} parent=5 // pred_region
      %s465 = ssub.s32 %s11, 2
      // Predicated region
      $region49: #{rpab_forward.1} parent=47 // pred_check
        %p466 = pneg %p173
      $region50: #{rpab_forward.1} parent=47 // pred_check_branch
        %468 = sbr.rel (%p466) target = $region52
      $region51: #{rpab_forward.1} parent=47 // pred_region
        %s469 = smul.u32 2, %s23
        %p470 = scmp.lt.s32.totalorder %s22, 1
        %s471 = scalar_select %p470, %s22, 1
        %p472 = scmp.lt.s32.totalorder %s469, 1
        %s473 = scalar_select %p472, %s469, 1
        %s474 = smul.addr %s471, 2
        %s475 = sadd.s32 %s473, %s474
        %s476 = smul.addr %s475, 4
        %s477 = scalar_lea.vmem %s5, %s476
      $region52: #{rpab_forward.1} parent=47 // pred_fallthru
        _
    $region48: #{rpab_forward.1} parent=5 // pred_fallthru
      _
  $region6: #{rpab_forward.1} parent=0 // loop_footer
    %s15 = sadd.s32 1, %s11
  $region7: #{rpab_forward.1} parent=0 // loop_footer_branch
    %10 = sbr.rel target = $region3
  $region8: #{rpab_forward.1} parent=0 // loop_exit
    _

</llo_original>
